<compile_context>
chip_gen: v6e
topology: v6e:2x2x1
jax: 0.10.0
libtpu: 0.0.40
codegen_flags: <defaults>
</compile_context>

<pallas_src>
import functools

import jax
import jax.numpy as jnp
from jax.experimental import pallas as pl
from jax.experimental.pallas import tpu as pltpu

_LANE = 128  # lane width for the lane-dense final projection output slab


def _round_up(a, b):
    return (a + b - 1) // b * b


def _default_matmul_dtype():
    """bf16 MXU operands on v6e/v7x; f32 on v5e (no bf16 VPU/EUP path)."""
    try:
        kind = jax.devices()[0].device_kind.lower()
        if "v5 lite" in kind or "v5e" in kind or "v5lite" in kind:
            return jnp.float32
    except Exception:
        pass
    return jnp.bfloat16


# ----------------------------- Pallas kernels -------------------------------

def _dot_f32(a, b):
    return jnp.dot(a, b, preferred_element_type=jnp.float32)


def _rgcn_zero_h_kernel(L_ref, x_ref, w_ref, b_ref, o_ref, *,
                        hidden, f_pad, gs, matmul_dtype):
    """Single GConvGRU step with H0 == 0 (the PyTorch module's call pattern).

    With H0 = 0 the h-path Chebyshev convs reduce to their biases and the
    reset gate is dead, so only the x-path conv for the z and h gates is
    needed:
        Z       = sigmoid(conv_x_z(X) + b_hz)
        H_tilde = tanh(conv_x_h(X) + b_hh)
        H       = (1 - Z) * H_tilde
    Chebyshev constants are folded into the packed weights, so only
    T1 = L@X and T2' = L@T1 are computed here.
    """
    L = L_ref[...]                                   # (N, N)  matmul_dtype
    x = x_ref[...]                                   # (N, Fp) matmul_dtype

    t1 = _dot_f32(L, x).astype(matmul_dtype)
    t2 = _dot_f32(L, t1).astype(matmul_dtype)

    conv = (_dot_f32(x, w_ref[0:f_pad, :]) +
            _dot_f32(t1, w_ref[f_pad:2 * f_pad, :]) +
            _dot_f32(t2, w_ref[2 * f_pad:3 * f_pad, :]) +
            b_ref[0:1, :])                           # (N, 2*GS), gates [z | h]

    z = jax.nn.sigmoid(conv[:, 0:hidden])
    h_tilde = jnp.tanh(conv[:, gs:gs + hidden])
    h_new = (1.0 - z) * h_tilde

    # TODO(synk): train-mode stochastic dropout omitted; eval Dropout == identity.
    feat = jnp.tanh(h_new).astype(matmul_dtype)
    wlin = w_ref[3 * f_pad:3 * f_pad + hidden, 0:_LANE]
    logits = _dot_f32(feat, wlin) + b_ref[1:2, 0:_LANE]
    o_ref[...] = jax.nn.sigmoid(logits)              # (N, 128) lane-dense


def _rgcn_general_kernel(L_ref, x_ref, h_ref, w_ref, b_ref, o_ref, *,
                         hidden, f_pad, gs, matmul_dtype):
    """Single GConvGRU step with an arbitrary hidden state H.

    Weight slab row layout (all offsets multiples of 8 sublanes):
      [0 , 3*Fp)        x-path taps 0..2, gate columns [z | r | h] at stride GS
      [3Fp, 3Fp+3H)     h-path z/r taps 0..2, gate columns [z | r] at stride GS
      [3Fp+3H, 3Fp+6H)  h-path candidate taps 0..2, columns [0:H)
      [3Fp+6H, 3Fp+7H)  final Linear, columns [0:128)
    """
    L = L_ref[...]                                   # (N, N)  matmul_dtype
    x = x_ref[...]                                   # (N, Fp) matmul_dtype
    h = h_ref[...]                                   # (N, H)  f32
    hm = h.astype(matmul_dtype)

    ox0, ox1, ox2 = 0, f_pad, 2 * f_pad
    oh0 = 3 * f_pad
    oh1, oh2 = oh0 + hidden, oh0 + 2 * hidden
    og0 = oh0 + 3 * hidden
    og1, og2 = og0 + hidden, og0 + 2 * hidden
    olin = og0 + 3 * hidden

    # x-path conv (all three gates + combined biases), folded Chebyshev basis.
    tx1 = _dot_f32(L, x).astype(matmul_dtype)
    tx2 = _dot_f32(L, tx1).astype(matmul_dtype)
    convx = (_dot_f32(x, w_ref[ox0:ox0 + f_pad, :]) +
             _dot_f32(tx1, w_ref[ox1:ox1 + f_pad, :]) +
             _dot_f32(tx2, w_ref[ox2:ox2 + f_pad, :]) +
             b_ref[0:1, :])                          # (N, 3*GS)

    # h-path conv for z and r gates.
    th1 = _dot_f32(L, hm).astype(matmul_dtype)
    th2 = _dot_f32(L, th1).astype(matmul_dtype)
    convh_zr = (_dot_f32(hm, w_ref[oh0:oh0 + hidden, 0:2 * gs]) +
                _dot_f32(th1, w_ref[oh1:oh1 + hidden, 0:2 * gs]) +
                _dot_f32(th2, w_ref[oh2:oh2 + hidden, 0:2 * gs]))   # (N, 2*GS)

    z = jax.nn.sigmoid(convx[:, 0:hidden] + convh_zr[:, 0:hidden])
    r = jax.nn.sigmoid(convx[:, gs:gs + hidden] + convh_zr[:, gs:gs + hidden])

    # candidate conv on H * R.
    hr = (h * r).astype(matmul_dtype)
    tr1 = _dot_f32(L, hr).astype(matmul_dtype)
    tr2 = _dot_f32(L, tr1).astype(matmul_dtype)
    convhh = (_dot_f32(hr, w_ref[og0:og0 + hidden, 0:gs]) +
              _dot_f32(tr1, w_ref[og1:og1 + hidden, 0:gs]) +
              _dot_f32(tr2, w_ref[og2:og2 + hidden, 0:gs]))          # (N, GS)

    h_tilde = jnp.tanh(convx[:, 2 * gs:2 * gs + hidden] + convhh[:, 0:hidden])
    h_new = z * h + (1.0 - z) * h_tilde

    # TODO(synk): train-mode stochastic dropout omitted; eval Dropout == identity.
    feat = jnp.tanh(h_new).astype(matmul_dtype)
    logits = _dot_f32(feat, w_ref[olin:olin + hidden, 0:_LANE]) + b_ref[1:2, 0:_LANE]
    o_ref[...] = jax.nn.sigmoid(logits)              # (N, 128) lane-dense


# ------------------------------ JAX wrapper ---------------------------------

def build_laplacian_hat(edge_index, edge_weight, num_nodes, lambda_max=2.0):
    """Dense equivalent of PyG ChebConv's __norm__ (sym normalization).

    L_hat = (2 / lambda_max) * (I - D^{-1/2} A D^{-1/2}) - I
    Self-loops in the input are removed (as ChebConv does).
    """
    row, col = edge_index[0], edge_index[1]
    w = jnp.where(row != col, edge_weight, 0.0)            # remove self loops
    A = jnp.zeros((num_nodes, num_nodes), jnp.float32).at[row, col].add(w)
    deg = A.sum(axis=1)
    dis = jnp.where(deg > 0, 1.0 / jnp.sqrt(deg), 0.0)      # inf -> 0 mask
    A_norm = dis[:, None] * A * dis[None, :]
    L = jnp.eye(num_nodes, dtype=jnp.float32) - A_norm
    return (2.0 / lambda_max) * L - jnp.eye(num_nodes, dtype=jnp.float32)


def pack_params(params, matmul_dtype):
    """Pack all weights/biases into lane-aligned, MXU-friendly slabs.

    Chebyshev constants are folded in: W0' = W0 - W2, W1' = W1, W2' = 2*W2,
    so the kernels only compute T1 = L@v and T2' = L@T1.
    Gate columns are placed at a stride of round_up(H, 128) lanes.
    """
    k, f, h = params["wxz"].shape
    assert k == 3, "kernel is specialized for Chebyshev K=3"
    assert h % 8 == 0, "hidden_dims must be a multiple of 8"
    f_pad = _round_up(f, 8)
    gs = _round_up(h, _LANE)

    def fold(w):  # (3, rows, h) -> folded taps [W0-W2, W1, 2*W2]
        return [w[0] - w[2], w[1], 2.0 * w[2]]

    wxz, wxr, wxh = fold(params["wxz"]), fold(params["wxr"]), fold(params["wxh"])
    whz, whr, whh = fold(params["whz"]), fold(params["whr"]), fold(params["whh"])

    bz = (params["bxz"] + params["bhz"])[0]
    br = (params["bxr"] + params["bhr"])[0]
    bh = (params["bxh"] + params["bhh"])[0]

    # ---- zero-hidden-state path: only the z and h gates are live -----------
    w0 = jnp.zeros((3 * f_pad + h, 2 * gs), jnp.float32)
    for t in range(3):
        r0 = t * f_pad
        w0 = w0.at[r0:r0 + f, 0:h].set(wxz[t])
        w0 = w0.at[r0:r0 + f, gs:gs + h].set(wxh[t])
    w0 = w0.at[3 * f_pad:3 * f_pad + h, 0:2].set(params["wlin"])

    b0 = jnp.zeros((2, 2 * gs), jnp.float32)
    b0 = b0.at[0, 0:h].set(bz)
    b0 = b0.at[0, gs:gs + h].set(bh)
    b0 = b0.at[1, 0:2].set(params["blin"][0])

    # ---- general path: full z / r / h gating --------------------------------
    wg = jnp.zeros((3 * f_pad + 7 * h, 3 * gs), jnp.float32)
    for t in range(3):
        r0 = t * f_pad
        wg = wg.at[r0:r0 + f, 0:h].set(wxz[t])
        wg = wg.at[r0:r0 + f, gs:gs + h].set(wxr[t])
        wg = wg.at[r0:r0 + f, 2 * gs:2 * gs + h].set(wxh[t])
    base = 3 * f_pad
    for t in range(3):
        r0 = base + t * h
        wg = wg.at[r0:r0 + h, 0:h].set(whz[t])
        wg = wg.at[r0:r0 + h, gs:gs + h].set(whr[t])
    base = 3 * f_pad + 3 * h
    for t in range(3):
        r0 = base + t * h
        wg = wg.at[r0:r0 + h, 0:h].set(whh[t])
    olin = 3 * f_pad + 6 * h
    wg = wg.at[olin:olin + h, 0:2].set(params["wlin"])

    bg = jnp.zeros((2, 3 * gs), jnp.float32)
    bg = bg.at[0, 0:h].set(bz)
    bg = bg.at[0, gs:gs + h].set(br)
    bg = bg.at[0, 2 * gs:2 * gs + h].set(bh)
    bg = bg.at[1, 0:2].set(params["blin"][0])

    return {
        "w_zero": w0.astype(matmul_dtype), "b_zero": b0,
        "w_gen": wg.astype(matmul_dtype), "b_gen": bg,
        "hidden": h, "f": f, "f_pad": f_pad, "gs": gs,
    }


def recurrent_gcn_forward(x, edge_index, edge_weight, params, h0=None,
                          matmul_dtype=None):
    """Forward pass of RecurrentGCN (eval mode). Returns (N, 2) probabilities.

    h0=None matches the PyTorch module (GConvGRU initializes H to zeros) and
    dispatches to the specialized kernel that skips the dead h-path.
    """
    if matmul_dtype is None:
        matmul_dtype = _default_matmul_dtype()

    n, f = x.shape
    packed = pack_params(params, matmul_dtype)
    hidden, f_pad, gs = packed["hidden"], packed["f_pad"], packed["gs"]

    # Pre-cast the large matmul operands once in the wrapper (no in-kernel
    # per-dot casts of L), and pad x's feature dim to a sublane multiple.
    l_hat = build_laplacian_hat(edge_index, edge_weight, n).astype(matmul_dtype)
    x_p = jnp.zeros((n, f_pad), matmul_dtype).at[:, :f].set(
        x.astype(matmul_dtype))

    vmem = pl.BlockSpec(memory_space=pltpu.MemorySpace.VMEM)
    out_shape = jax.ShapeDtypeStruct((n, _LANE), jnp.float32)
    compiler_params = pltpu.CompilerParams(vmem_limit_bytes=32 * 1024 * 1024)

    if h0 is None:
        inputs = (l_hat, x_p, packed["w_zero"], packed["b_zero"])
        kernel = functools.partial(_rgcn_zero_h_kernel, hidden=hidden,
                                   f_pad=f_pad, gs=gs,
                                   matmul_dtype=matmul_dtype)
    else:
        inputs = (l_hat, x_p, h0.astype(jnp.float32), packed["w_gen"],
                  packed["b_gen"])
        kernel = functools.partial(_rgcn_general_kernel, hidden=hidden,
                                   f_pad=f_pad, gs=gs,
                                   matmul_dtype=matmul_dtype)

    out = pl.pallas_call(
        kernel,
        out_shape=out_shape,
        in_specs=[vmem] * len(inputs),
        out_specs=vmem,
        compiler_params=compiler_params,
    )(*inputs)
    return out[:, :2]   # drop lane-padding columns (they hold sigmoid(0)=0.5)


def init_params(key, input_size, hidden_dims, k=3):
    ks = jax.random.split(key, 14)

    def w(kk, shape, scale=0.1):
        return scale * jax.random.normal(kk, shape, jnp.float32)

    return {
        # x-path Chebyshev weights: (K, F, H); h-path: (K, H, H); biases (1, H)
        "wxz": w(ks[0], (k, input_size, hidden_dims)),
        "whz": w(ks[1], (k, hidden_dims, hidden_dims)),
        "bxz": w(ks[2], (1, hidden_dims)),
        "bhz": w(ks[3], (1, hidden_dims)),
        "wxr": w(ks[4], (k, input_size, hidden_dims)),
        "whr": w(ks[5], (k, hidden_dims, hidden_dims)),
        "bxr": w(ks[6], (1, hidden_dims)),
        "bhr": w(ks[7], (1, hidden_dims)),
        "wxh": w(ks[8], (k, input_size, hidden_dims)),
        "whh": w(ks[9], (k, hidden_dims, hidden_dims)),
        "bxh": w(ks[10], (1, hidden_dims)),
        "bhh": w(ks[11], (1, hidden_dims)),
        # final Linear(hidden, 2): stored already transposed as (H, 2)
        "wlin": w(ks[12], (hidden_dims, 2)),
        "blin": w(ks[13], (1, 2)),
    }


# ------------------------- pure-JAX reference (f32) --------------------------

def reference_forward(x, edge_index, edge_weight, params, h0=None):
    n = x.shape[0]
    hidden = params["wxz"].shape[-1]
    L = build_laplacian_hat(edge_index, edge_weight, n)

    def cheb(inp, w, b):
        t0 = inp
        t1 = L @ t0
        t2 = 2.0 * (L @ t1) - t0
        return t0 @ w[0] + t1 @ w[1] + t2 @ w[2] + b

    h = jnp.zeros((n, hidden), jnp.float32) if h0 is None else h0
    z = jax.nn.sigmoid(cheb(x, params["wxz"], params["bxz"]) +
                       cheb(h, params["whz"], params["bhz"]))
    r = jax.nn.sigmoid(cheb(x, params["wxr"], params["bxr"]) +
                       cheb(h, params["whr"], params["bhr"]))
    h_tilde = jnp.tanh(cheb(x, params["wxh"], params["bxh"]) +
                       cheb(h * r, params["whh"], params["bhh"]))
    h_new = z * h + (1.0 - z) * h_tilde
    feat = jnp.tanh(h_new)
    return jax.nn.sigmoid(feat @ params["wlin"] + params["blin"])


if __name__ == "__main__":
    key = jax.random.PRNGKey(0)
    k_feat, k_src, k_dst, k_w, k_par, k_h = jax.random.split(key, 6)

    num_nodes, input_size, hidden_dims, num_edges = 16, 4, 32, 48

    x = jax.random.normal(k_feat, (num_nodes, input_size), jnp.float32)
    src = jax.random.randint(k_src, (num_edges,), 0, num_nodes)
    dst = jax.random.randint(k_dst, (num_edges,), 0, num_nodes)
    edge_index = jnp.stack([src, dst], axis=0)                     # (2, E)
    edge_weight = jax.random.uniform(k_w, (num_edges,), jnp.float32) + 0.1

    params = init_params(k_par, input_size, hidden_dims)

    # Path 1: the module's actual call pattern (H0 = 0 -> specialized kernel).
    out = recurrent_gcn_forward(x, edge_index, edge_weight, params)
    jax.block_until_ready(out)
    ref = reference_forward(x, edge_index, edge_weight, params)
    assert out.shape == (num_nodes, 2)
    assert bool(jnp.all((out >= 0.0) & (out <= 1.0)))
    assert bool(jnp.max(jnp.abs(out - ref)) < 5e-2), "zero-h path mismatch"

    # Path 2: general hidden-state kernel (full GConvGRU gating).
    h0 = 0.1 * jax.random.normal(k_h, (num_nodes, hidden_dims), jnp.float32)
    out_g = recurrent_gcn_forward(x, edge_index, edge_weight, params, h0=h0)
    jax.block_until_ready(out_g)
    ref_g = reference_forward(x, edge_index, edge_weight, params, h0=h0)
    assert bool(jnp.max(jnp.abs(out_g - ref_g)) < 5e-2), "general path mismatch"

    print("KERNEL_OK")
</pallas_src>

<mosaic_0001>
module attributes {stable_mosaic.version = 11 : i64} {
  func.func @_rgcn_zero_h_kernel(%arg0: memref<16x16xbf16, #tpu.memory_space<vmem>>, %arg1: memref<16x8xbf16, #tpu.memory_space<vmem>>, %arg2: memref<56x256xbf16, #tpu.memory_space<vmem>>, %arg3: memref<2x256xf32, #tpu.memory_space<vmem>>, %arg4: memref<16x128xf32, #tpu.memory_space<vmem>>) attributes {dimension_semantics = [], scalar_prefetch = 0 : i64, scratch_operands = 0 : i64, tpu.core_type = #tpu.core_type<tc>} {
    %c0 = arith.constant 0 : index
    %c0_0 = arith.constant 0 : index
    %0 = vector.load %arg0[%c0, %c0_0] : memref<16x16xbf16, #tpu.memory_space<vmem>>, vector<16x16xbf16>
    %c0_1 = arith.constant 0 : index
    %c0_2 = arith.constant 0 : index
    %1 = vector.load %arg1[%c0_1, %c0_2] : memref<16x8xbf16, #tpu.memory_space<vmem>>, vector<16x8xbf16>
    %cst = arith.constant dense<0.000000e+00> : vector<16x8xf32>
    %2 = tpu.matmul %0, %1, %cst {dimension_numbers = #tpu.dot_dimension_numbers<[1], [0], [0], [1], [0, 0, 1, 1], [], []>} : vector<16x16xbf16>, vector<16x8xbf16>, vector<16x8xf32> -> vector<16x8xf32>
    %3 = arith.truncf %2 : vector<16x8xf32> to vector<16x8xbf16>
    %cst_3 = arith.constant dense<0.000000e+00> : vector<16x8xf32>
    %4 = tpu.matmul %0, %3, %cst_3 {dimension_numbers = #tpu.dot_dimension_numbers<[1], [0], [0], [1], [0, 0, 1, 1], [], []>} : vector<16x16xbf16>, vector<16x8xbf16>, vector<16x8xf32> -> vector<16x8xf32>
    %5 = arith.truncf %4 : vector<16x8xf32> to vector<16x8xbf16>
    %c0_4 = arith.constant 0 : index
    %c0_5 = arith.constant 0 : index
    %6 = vector.load %arg2[%c0_4, %c0_5] : memref<56x256xbf16, #tpu.memory_space<vmem>>, vector<8x256xbf16>
    %cst_6 = arith.constant dense<0.000000e+00> : vector<16x256xf32>
    %7 = tpu.matmul %1, %6, %cst_6 {dimension_numbers = #tpu.dot_dimension_numbers<[1], [0], [0], [1], [0, 0, 1, 1], [], []>} : vector<16x8xbf16>, vector<8x256xbf16>, vector<16x256xf32> -> vector<16x256xf32>
    %c8 = arith.constant 8 : index
    %c0_7 = arith.constant 0 : index
    %8 = vector.load %arg2[%c8, %c0_7] : memref<56x256xbf16, #tpu.memory_space<vmem>>, vector<8x256xbf16>
    %cst_8 = arith.constant dense<0.000000e+00> : vector<16x256xf32>
    %9 = tpu.matmul %3, %8, %cst_8 {dimension_numbers = #tpu.dot_dimension_numbers<[1], [0], [0], [1], [0, 0, 1, 1], [], []>} : vector<16x8xbf16>, vector<8x256xbf16>, vector<16x256xf32> -> vector<16x256xf32>
    %10 = arith.addf %7, %9 : vector<16x256xf32>
    %c16 = arith.constant 16 : index
    %c0_9 = arith.constant 0 : index
    %11 = vector.load %arg2[%c16, %c0_9] : memref<56x256xbf16, #tpu.memory_space<vmem>>, vector<8x256xbf16>
    %cst_10 = arith.constant dense<0.000000e+00> : vector<16x256xf32>
    %12 = tpu.matmul %5, %11, %cst_10 {dimension_numbers = #tpu.dot_dimension_numbers<[1], [0], [0], [1], [0, 0, 1, 1], [], []>} : vector<16x8xbf16>, vector<8x256xbf16>, vector<16x256xf32> -> vector<16x256xf32>
    %13 = arith.addf %10, %12 : vector<16x256xf32>
    %c0_11 = arith.constant 0 : index
    %c0_12 = arith.constant 0 : index
    %14 = vector.load %arg3[%c0_11, %c0_12] : memref<2x256xf32, #tpu.memory_space<vmem>>, vector<1x256xf32>
    %15 = vector.broadcast %14 : vector<1x256xf32> to vector<16x256xf32>
    %16 = arith.addf %13, %15 : vector<16x256xf32>
    %17 = vector.extract_strided_slice %16 {offsets = [0, 0], sizes = [16, 32], strides = [1, 1]} : vector<16x256xf32> to vector<16x32xf32>
    %18 = arith.negf %17 : vector<16x32xf32>
    %19 = math.exp %18 : vector<16x32xf32>
    %cst_13 = arith.constant 1.000000e+00 : f32
    %20 = vector.broadcast %cst_13 : f32 to vector<16x32xf32>
    %21 = arith.addf %20, %19 : vector<16x32xf32>
    %22 = arith.divf %20, %21 : vector<16x32xf32>
    %23 = vector.extract_strided_slice %16 {offsets = [0, 128], sizes = [16, 32], strides = [1, 1]} : vector<16x256xf32> to vector<16x32xf32>
    %24 = math.tanh %23 : vector<16x32xf32>
    %cst_14 = arith.constant 1.000000e+00 : f32
    %25 = vector.broadcast %cst_14 : f32 to vector<16x32xf32>
    %26 = arith.subf %25, %22 : vector<16x32xf32>
    %27 = arith.mulf %26, %24 : vector<16x32xf32>
    %28 = math.tanh %27 : vector<16x32xf32>
    %29 = arith.truncf %28 : vector<16x32xf32> to vector<16x32xbf16>
    %c24 = arith.constant 24 : index
    %c0_15 = arith.constant 0 : index
    %30 = vector.load %arg2[%c24, %c0_15] : memref<56x256xbf16, #tpu.memory_space<vmem>>, vector<32x128xbf16>
    %cst_16 = arith.constant dense<0.000000e+00> : vector<16x128xf32>
    %31 = tpu.matmul %29, %30, %cst_16 {dimension_numbers = #tpu.dot_dimension_numbers<[1], [0], [0], [1], [0, 0, 1, 1], [], []>} : vector<16x32xbf16>, vector<32x128xbf16>, vector<16x128xf32> -> vector<16x128xf32>
    %c1 = arith.constant 1 : index
    %c0_17 = arith.constant 0 : index
    %32 = vector.load %arg3[%c1, %c0_17] : memref<2x256xf32, #tpu.memory_space<vmem>>, vector<1x128xf32>
    %33 = vector.broadcast %32 : vector<1x128xf32> to vector<16x128xf32>
    %34 = arith.addf %31, %33 : vector<16x128xf32>
    %35 = arith.negf %34 : vector<16x128xf32>
    %36 = math.exp %35 : vector<16x128xf32>
    %cst_18 = arith.constant 1.000000e+00 : f32
    %37 = vector.broadcast %cst_18 : f32 to vector<16x128xf32>
    %38 = arith.addf %37, %36 : vector<16x128xf32>
    %39 = arith.divf %37, %38 : vector<16x128xf32>
    %c0_19 = arith.constant 0 : index
    %c0_20 = arith.constant 0 : index
    %40 = vector.load %arg4[%c0_19, %c0_20] : memref<16x128xf32, #tpu.memory_space<vmem>>, vector<16x128xf32>
    tpu.vector_store %arg4[%c0_19, %c0_20], %39 {strides = array<i32>} : memref<16x128xf32, #tpu.memory_space<vmem>>, vector<16x128xf32>,
    return
  }
}

</mosaic_0001>

<llo_original>
// kernel: tpu_custom_call.1
$region0: #{tpu_custom_call.1}
  #allocation0 [shape = 'u32[]', space=smem, size = 0x4, offset = 0x4, fixed_abs, tag = 'smem constant byte address 0x4 - core index']
  #allocation1 [shape = 'u32[144,128]{1,0:T(1,128)}', space=vmem, size = 0x12000, scoped, tag = 'internal scratch']
  %s0 = inlined_call_operand.vmem [shape: bf16[16,16], index: 0, kind: input, shape index: {}]
  %s1 = inlined_call_operand.vmem [shape: bf16[16,8], index: 1, kind: input, shape index: {}]
  %s2 = inlined_call_operand.hbm [shape: bf16[56,256], index: 2, kind: input, shape index: {}]
  %s3 = inlined_call_operand.vmem [shape: f32[2,256], index: 3, kind: input, shape index: {}]
  %s4 = inlined_call_operand.hbm [shape: f32[16,128], index: 4, kind: output, shape index: {}]
  %s5 = sld [smem:[#allocation0]]
  $region30: #{tpu_custom_call.1} parent=0
    _
  %s7 = ssub.s32 1, %s5
  %s8 = scalar_select 0, %s7, %s5
  $region1: #{tpu_custom_call.1} parent=0
    #allocation2 [shape = 'u8[28672]{0}', space=vmem, size = 0x7000, scoped, tag = 'input window, operand 2, single buffered']
    #allocation3 [shape = 's32[1]{0}', space=sflag, size = 0x4, scoped, tag = 'scoped memory for tpu_custom_call.1']
    #allocation4 [shape = 's32[1]{0}', space=sflag, size = 0x4, scoped, tag = 'scoped memory for tpu_custom_call.1']
    #allocation5 [shape = 'u8[8192]{0}', space=vmem, size = 0x2000, scoped, tag = 'output window, operand 0, single buffered']
    %9 = vsyncpa [#allocation3], 0
    %10 = vsyncpa [#allocation4], 0
    // Predicated region
    $region2: #{tpu_custom_call.1} parent=1 // pred_check
      _
    $region3: #{tpu_custom_call.1} parent=1 // pred_check_branch
      %12 = sbr.rel (0) target = $region5
    $region4: #{tpu_custom_call.1} parent=1 // pred_region
      _
    $region5: #{tpu_custom_call.1} parent=1 // pred_fallthru
      _
    // Predicated region
    $region6: #{tpu_custom_call.1} parent=1 // pred_check
      _
    $region7: #{tpu_custom_call.1} parent=1 // pred_check_branch
      %14 = sbr.rel (0) target = $region9
    $region8: #{tpu_custom_call.1} parent=1 // pred_region
      _
    $region9: #{tpu_custom_call.1} parent=1 // pred_fallthru
      _
    // Predicated region
    $region10: #{tpu_custom_call.1} parent=1 // pred_check
      _
    $region11: #{tpu_custom_call.1} parent=1 // pred_check_branch
      %16 = sbr.rel (0) target = $region13
    $region12: #{tpu_custom_call.1} parent=1 // pred_region
      %s18 = ssub.s32 896, 896
      %19 = vsyncadd [#allocation3], %s18
      %s20 = sshll.u32 [#allocation2], 4
      %s21 = int_to_ptr.vmem [resolvable:$true] %s20
      %26 = dma.hbm_to_vmem [thread:$0]  %s2, 896, %s21, [#allocation3], 128, 128, 8
    $region13: #{tpu_custom_call.1} parent=1 // pred_fallthru
      _
    // Predicated region
    $region14: #{tpu_custom_call.1} parent=1 // pred_check
      _
    $region15: #{tpu_custom_call.1} parent=1 // pred_check_branch
      %28 = sbr.rel (0) target = $region17
    $region16: #{tpu_custom_call.1} parent=1 // pred_region
      _
    $region17: #{tpu_custom_call.1} parent=1 // pred_fallthru
      _
    // Predicated region
    $region18: #{tpu_custom_call.1} parent=1 // pred_check
      _
    $region19: #{tpu_custom_call.1} parent=1 // pred_check_branch
      %30 = sbr.rel (0) target = $region21
    $region20: #{tpu_custom_call.1} parent=1 // pred_region
      %31 = dma.done [#allocation3], 896
    $region21: #{tpu_custom_call.1} parent=1 // pred_fallthru
      _
    %v33 = vld [vmem:[%s0] sm:$0xf]
    %v34 = vld [vmem:[%s0 + $0x4] sm:$0xf]
    %v35 = vld [vmem:[%s1] sm:$0xf]
    %v36 = vld [vmem:[%s1 + $0x4] sm:$0xf]
    %v39 = vunpack.c.l.b16 %v33
    %v40 = vunpack.c.l.b16 %v34
    %v41 = vpack.c.b16 %v40, %v39
    %v44 = vunpack.c.l.b16 %v35
    %v45 = vunpack.c.l.b16 %v36
    %v46 = vpack.c.b16 %v45, %v44
    %vm48 = vcmask 130048
    %v50 = vsel %vm48, %v41, 0
    %52 = vmatprep.subr.bf16.mxu0 0
    %53 = vmatpush1.bf16.msra.mxu0 0
    %54 = vmatprep.subr.bf16.mxu0 0
    %55 = vmatpush1.bf16.msra.mxu0 0
    %56 = vmatprep.subr.bf16.mxu0 0
    %57 = vmatpush1.bf16.msra.mxu0 0
    %58 = vmatprep.subr.bf16.mxu0 0
    %59 = vmatpush1.bf16.msra.mxu0 0
    %60 = vmatprep.subr.bf16.mxu0 0
    %61 = vmatpush1.bf16.msra.mxu0 0
    %62 = vmatprep.subr.bf16.mxu0 0
    %63 = vmatpush1.bf16.msra.mxu0 0
    %64 = vmatprep.subr.bf16.mxu0 0
    %65 = vmatpush1.bf16.msra.mxu0 0
    %66 = vmatprep.subr.bf16.mxu0 0
    %67 = vmatpush1.bf16.msra.mxu0 %v46
    %68 = vmatprep.subr.bf16.mxu0 0
    %69 = vmatpush2.bf16.msra.mxu0 0
    %70 = vmatprep.subr.bf16.mxu0 0
    %71 = vmatpush2.bf16.msra.mxu0 0
    %72 = vmatprep.subr.bf16.mxu0 0
    %73 = vmatpush2.bf16.msra.mxu0 0
    %74 = vmatprep.subr.bf16.mxu0 0
    %75 = vmatpush2.bf16.msra.mxu0 0
    %76 = vmatprep.subr.bf16.mxu0 0
    %77 = vmatpush2.bf16.msra.mxu0 0
    %78 = vmatprep.subr.bf16.mxu0 0
    %79 = vmatpush2.bf16.msra.mxu0 0
    %80 = vmatprep.subr.bf16.mxu0 0
    %81 = vmatpush2.bf16.msra.mxu0 0
    %82 = vmatprep.subr.bf16.mxu0 0
    %83 = vmatpush2.bf16.msra.mxu0 0
    %84 = vmatprep.mubr.bf16.mxu0 0
    %85 = vmatmul.mubr.bf16.gmra.mxu0 %v50
    %v86 = vpop.f32.mrf.mxu0
    %v87 = vadd.f32 0.0, %v86
    %v88 = vpop.f32.mrf.mxu0
    %v89 = vpop.f32.mrf.mxu0
    %v90 = vadd.f32 0.0, %v89
    %v91 = vpop.f32.mrf.mxu0
    %92 = vdwg.mxu0
    %v93 = vpack.c.bf16 %v90, %v87
    %94 = vmatprep.subr.bf16.mxu0 0
    %95 = vmatpush1.bf16.msra.mxu0 0
    %96 = vmatprep.subr.bf16.mxu0 0
    %97 = vmatpush1.bf16.msra.mxu0 0
    %98 = vmatprep.subr.bf16.mxu0 0
    %99 = vmatpush1.bf16.msra.mxu0 0
    %100 = vmatprep.subr.bf16.mxu0 0
    %101 = vmatpush1.bf16.msra.mxu0 0
    %102 = vmatprep.subr.bf16.mxu0 0
    %103 = vmatpush1.bf16.msra.mxu0 0
    %104 = vmatprep.subr.bf16.mxu0 0
    %105 = vmatpush1.bf16.msra.mxu0 0
    %106 = vmatprep.subr.bf16.mxu0 0
    %107 = vmatpush1.bf16.msra.mxu0 0
    %108 = vmatprep.subr.bf16.mxu0 0
    %109 = vmatpush1.bf16.msra.mxu0 %v93
    %110 = vmatprep.subr.bf16.mxu0 0
    %111 = vmatpush2.bf16.msra.mxu0 0
    %112 = vmatprep.subr.bf16.mxu0 0
    %113 = vmatpush2.bf16.msra.mxu0 0
    %114 = vmatprep.subr.bf16.mxu0 0
    %115 = vmatpush2.bf16.msra.mxu0 0
    %116 = vmatprep.subr.bf16.mxu0 0
    %117 = vmatpush2.bf16.msra.mxu0 0
    %118 = vmatprep.subr.bf16.mxu0 0
    %119 = vmatpush2.bf16.msra.mxu0 0
    %120 = vmatprep.subr.bf16.mxu0 0
    %121 = vmatpush2.bf16.msra.mxu0 0
    %122 = vmatprep.subr.bf16.mxu0 0
    %123 = vmatpush2.bf16.msra.mxu0 0
    %124 = vmatprep.subr.bf16.mxu0 0
    %125 = vmatpush2.bf16.msra.mxu0 0
    %126 = vmatprep.mubr.bf16.mxu0 0
    %127 = vmatmul.mubr.bf16.gmra.mxu0 %v50
    %v128 = vpop.f32.mrf.mxu0
    %v129 = vadd.f32 0.0, %v128
    %v130 = vpop.f32.mrf.mxu0
    %v131 = vpop.f32.mrf.mxu0
    %v132 = vadd.f32 0.0, %v131
    %v133 = vpop.f32.mrf.mxu0
    %134 = vdwg.mxu0
    %v135 = vpack.c.bf16 %v132, %v129
    %v136 = vld [vmem:[#allocation2] sm:$0xff]
    %v137 = vld [vmem:[#allocation2 + $0x8] sm:$0xff]
    %v139 = vunpack.c.l.b16 %v137
    %v140 = vunpack.c.h.b16 %v137
    %v141 = vpack.c.b16 %v139, %v139
    %v142 = vpack.c.b16 %v140, %v140
    %vm143 = vcmask 64512
    %v145 = vsel %vm143, %v93, 0
    %vm147 = vcmask 1043456
    %v149 = vsel %vm147, %v141, 0
    %v152 = vsel %vm147, %v142, 0
    %154 = vmatprep.subr.bf16.mxu0 0
    %155 = vmatpush1.bf16.msra.mxu0 0
    %156 = vmatprep.subr.bf16.mxu0 0
    %157 = vmatpush1.bf16.msra.mxu0 0
    %158 = vmatprep.subr.bf16.mxu0 0
    %159 = vmatpush1.bf16.msra.mxu0 0
    %160 = vmatprep.subr.bf16.mxu0 0
    %161 = vmatpush1.bf16.msra.mxu0 0
    %162 = vmatprep.subr.bf16.mxu0 0
    %163 = vmatpush1.bf16.msra.mxu0 0
    %164 = vmatprep.subr.bf16.mxu0 0
    %165 = vmatpush1.bf16.msra.mxu0 0
    %166 = vmatprep.subr.bf16.mxu0 0
    %167 = vmatpush1.bf16.msra.mxu0 0
    %168 = vmatprep.subr.bf16.mxu0 %v152
    %169 = vmatpush1.bf16.msra.mxu0 %v149
    %170 = vmatprep.subr.bf16.mxu0 0
    %171 = vmatpush2.bf16.msra.mxu0 0
    %172 = vmatprep.subr.bf16.mxu0 0
    %173 = vmatpush2.bf16.msra.mxu0 0
    %174 = vmatprep.subr.bf16.mxu0 0
    %175 = vmatpush2.bf16.msra.mxu0 0
    %176 = vmatprep.subr.bf16.mxu0 0
    %177 = vmatpush2.bf16.msra.mxu0 0
    %178 = vmatprep.subr.bf16.mxu0 0
    %179 = vmatpush2.bf16.msra.mxu0 0
    %180 = vmatprep.subr.bf16.mxu0 0
    %181 = vmatpush2.bf16.msra.mxu0 0
    %182 = vmatprep.subr.bf16.mxu0 0
    %183 = vmatpush2.bf16.msra.mxu0 0
    %184 = vmatprep.subr.bf16.mxu0 0
    %185 = vmatpush2.bf16.msra.mxu0 0
    %186 = vmatprep.mubr.bf16.mxu0 0
    %187 = vmatmul.mubr.bf16.gmra.mxu0 %v145
    %v188 = vpop.f32.mrf.mxu0
    %v189 = vadd.f32 0.0, %v188
    %v190 = vpop.f32.mrf.mxu0
    %v191 = vadd.f32 0.0, %v190
    %v192 = vpop.f32.mrf.mxu0
    %v193 = vadd.f32 0.0, %v192
    %v194 = vpop.f32.mrf.mxu0
    %v195 = vadd.f32 0.0, %v194
    %196 = vdwg.mxu0
    %v198 = vunpack.c.l.b16 %v136
    %v199 = vunpack.c.h.b16 %v136
    %v200 = vpack.c.b16 %v198, %v198
    %v201 = vpack.c.b16 %v199, %v199
    %v203 = vsel %vm143, %v46, 0
    %v206 = vsel %vm147, %v200, 0
    %v209 = vsel %vm147, %v201, 0
    %211 = vmatprep.subr.bf16.mxu0 0
    %212 = vmatpush1.bf16.msra.mxu0 0
    %213 = vmatprep.subr.bf16.mxu0 0
    %214 = vmatpush1.bf16.msra.mxu0 0
    %215 = vmatprep.subr.bf16.mxu0 0
    %216 = vmatpush1.bf16.msra.mxu0 0
    %217 = vmatprep.subr.bf16.mxu0 0
    %218 = vmatpush1.bf16.msra.mxu0 0
    %219 = vmatprep.subr.bf16.mxu0 0
    %220 = vmatpush1.bf16.msra.mxu0 0
    %221 = vmatprep.subr.bf16.mxu0 0
    %222 = vmatpush1.bf16.msra.mxu0 0
    %223 = vmatprep.subr.bf16.mxu0 0
    %224 = vmatpush1.bf16.msra.mxu0 0
    %225 = vmatprep.subr.bf16.mxu0 %v209
    %226 = vmatpush1.bf16.msra.mxu0 %v206
    %227 = vmatprep.subr.bf16.mxu0 0
    %228 = vmatpush2.bf16.msra.mxu0 0
    %229 = vmatprep.subr.bf16.mxu0 0
    %230 = vmatpush2.bf16.msra.mxu0 0
    %231 = vmatprep.subr.bf16.mxu0 0
    %232 = vmatpush2.bf16.msra.mxu0 0
    %233 = vmatprep.subr.bf16.mxu0 0
    %234 = vmatpush2.bf16.msra.mxu0 0
    %235 = vmatprep.subr.bf16.mxu0 0
    %236 = vmatpush2.bf16.msra.mxu0 0
    %237 = vmatprep.subr.bf16.mxu0 0
    %238 = vmatpush2.bf16.msra.mxu0 0
    %239 = vmatprep.subr.bf16.mxu0 0
    %240 = vmatpush2.bf16.msra.mxu0 0
    %241 = vmatprep.subr.bf16.mxu0 0
    %242 = vmatpush2.bf16.msra.mxu0 0
    %243 = vmatprep.mubr.bf16.mxu0 0
    %244 = vmatmul.mubr.bf16.gmra.mxu0 %v203
    %v245 = vpop.f32.mrf.mxu0
    %v246 = vadd.f32 %v189, %v245
    %v247 = vpop.f32.mrf.mxu0
    %v248 = vadd.f32 %v191, %v247
    %v249 = vpop.f32.mrf.mxu0
    %v250 = vadd.f32 %v193, %v249
    %v251 = vpop.f32.mrf.mxu0
    %v252 = vadd.f32 %v195, %v251
    %253 = vdwg.mxu0
    %v254 = vld [vmem:[#allocation2 + $0x10] sm:$0xff]
    %v256 = vunpack.c.l.b16 %v254
    %v257 = vunpack.c.h.b16 %v254
    %v258 = vpack.c.b16 %v256, %v256
    %v259 = vpack.c.b16 %v257, %v257
    %v261 = vsel %vm143, %v135, 0
    %v264 = vsel %vm147, %v258, 0
    %v267 = vsel %vm147, %v259, 0
    %269 = vmatprep.subr.bf16.mxu0 0
    %270 = vmatpush1.bf16.msra.mxu0 0
    %271 = vmatprep.subr.bf16.mxu0 0
    %272 = vmatpush1.bf16.msra.mxu0 0
    %273 = vmatprep.subr.bf16.mxu0 0
    %274 = vmatpush1.bf16.msra.mxu0 0
    %275 = vmatprep.subr.bf16.mxu0 0
    %276 = vmatpush1.bf16.msra.mxu0 0
    %277 = vmatprep.subr.bf16.mxu0 0
    %278 = vmatpush1.bf16.msra.mxu0 0
    %279 = vmatprep.subr.bf16.mxu0 0
    %280 = vmatpush1.bf16.msra.mxu0 0
    %281 = vmatprep.subr.bf16.mxu0 0
    %282 = vmatpush1.bf16.msra.mxu0 0
    %283 = vmatprep.subr.bf16.mxu0 %v267
    %284 = vmatpush1.bf16.msra.mxu0 %v264
    %285 = vmatprep.subr.bf16.mxu0 0
    %286 = vmatpush2.bf16.msra.mxu0 0
    %287 = vmatprep.subr.bf16.mxu0 0
    %288 = vmatpush2.bf16.msra.mxu0 0
    %289 = vmatprep.subr.bf16.mxu0 0
    %290 = vmatpush2.bf16.msra.mxu0 0
    %291 = vmatprep.subr.bf16.mxu0 0
    %292 = vmatpush2.bf16.msra.mxu0 0
    %293 = vmatprep.subr.bf16.mxu0 0
    %294 = vmatpush2.bf16.msra.mxu0 0
    %295 = vmatprep.subr.bf16.mxu0 0
    %296 = vmatpush2.bf16.msra.mxu0 0
    %297 = vmatprep.subr.bf16.mxu0 0
    %298 = vmatpush2.bf16.msra.mxu0 0
    %299 = vmatprep.subr.bf16.mxu0 0
    %300 = vmatpush2.bf16.msra.mxu0 0
    %301 = vmatprep.mubr.bf16.mxu0 0
    %302 = vmatmul.mubr.bf16.gmra.mxu0 %v261
    %v303 = vpop.f32.mrf.mxu0
    %v304 = vadd.f32 0.0, %v303
    %v305 = vpop.f32.mrf.mxu0
    %v306 = vadd.f32 0.0, %v305
    %v307 = vpop.f32.mrf.mxu0
    %v308 = vadd.f32 0.0, %v307
    %v309 = vpop.f32.mrf.mxu0
    %v310 = vadd.f32 0.0, %v309
    %311 = vdwg.mxu0
    %v312 = vadd.f32 %v246, %v304
    %v313 = vadd.f32 %v248, %v306
    %v314 = vadd.f32 %v250, %v308
    %v315 = vadd.f32 %v252, %v310
    %v316 = vld [vmem:[%s3] ss:$2 sm:$0x3]
    %v318 = vlaneseq
    %v319 = vshrl.u32 %v318, 7
    %v320 = vsub.s32 0, %v319
    %v321 = vrot.slane %v316, %v320
    %v322 = vlaneseq
    %v323 = vshrl.u32 %v322, 7
    %v324 = vsub.s32 1, %v323
    %v325 = vrot.slane %v316, %v324
    %v328 = vadd.f32 %v312, %v321
    %v329 = vadd.f32 %v313, %v325
    %v330 = vadd.f32 %v314, %v321
    %v331 = vadd.f32 %v315, %v325
    %v332 = vxor.u32 %v328, 2147483648
    %v333 = vxor.u32 %v330, 2147483648
    %v334 = vmul.f32 %v332, 1.442695
    %v335 = vpow.pop %v334
    %v336 = vmul.f32 %v333, 1.442695
    %v337 = vpow.pop %v336
    %v338 = vadd.f32 %v335, 1.0
    %v339 = vadd.f32 %v337, 1.0
    %v340 = vrcp.pop %v338
    %v341 = vmul.f32 1.0, %v340
    %v342 = vrcp.pop %v339
    %v343 = vmul.f32 1.0, %v342
    %v344 = vtanh.pop %v329
    %v345 = vtanh.pop %v331
    %v346 = vsub.f32 1.0, %v341
    %v347 = vsub.f32 1.0, %v343
    %v348 = vmul.f32 %v346, %v344
    %v349 = vmul.f32 %v347, %v345
    %v350 = vtanh.pop %v348
    %v351 = vtanh.pop %v349
    %v352 = vpack.c.bf16 %v351, %v350
    %v353 = vld [vmem:[#allocation2 + $0x18] sm:$0xf]
    %v354 = vld [vmem:[#allocation2 + $0x20] sm:$0xf]
    %v355 = vld [vmem:[#allocation2 + $0x28] sm:$0xf]
    %v356 = vld [vmem:[#allocation2 + $0x30] sm:$0xf]
    %v357 = vld [vmem:[%s3 + $0x1] sm:$0x1]
    %v358 = vlaneseq
    %v359 = vshrl.u32 %v358, 7
    %v360 = vsub.s32 0, %v359
    %v361 = vrot.slane %v357, %v360
    %v366 = vunpack.c.l.b16 %v353
    %v367 = vunpack.c.l.b16 %v354
    %v368 = vunpack.c.l.b16 %v355
    %v369 = vunpack.c.l.b16 %v356
    %v370 = vpack.c.b16 %v367, %v366
    %v371 = vpack.c.b16 %v369, %v368
    %vm374 = vcmask 261120
    %v376 = vsel %vm374, %v352, 0
    %378 = vmatprep.subr.bf16.mxu0 0
    %379 = vmatpush1.bf16.msra.mxu0 0
    %380 = vmatprep.subr.bf16.mxu0 0
    %381 = vmatpush1.bf16.msra.mxu0 0
    %382 = vmatprep.subr.bf16.mxu0 0
    %383 = vmatpush1.bf16.msra.mxu0 0
    %384 = vmatprep.subr.bf16.mxu0 0
    %385 = vmatpush1.bf16.msra.mxu0 0
    %386 = vmatprep.subr.bf16.mxu0 0
    %387 = vmatpush1.bf16.msra.mxu0 0
    %388 = vmatprep.subr.bf16.mxu0 0
    %389 = vmatpush1.bf16.msra.mxu0 0
    %390 = vmatprep.subr.bf16.mxu0 0
    %391 = vmatpush1.bf16.msra.mxu0 %v371
    %392 = vmatprep.subr.bf16.mxu0 0
    %393 = vmatpush1.bf16.msra.mxu0 %v370
    %394 = vmatprep.subr.bf16.mxu0 0
    %395 = vmatpush2.bf16.msra.mxu0 0
    %396 = vmatprep.subr.bf16.mxu0 0
    %397 = vmatpush2.bf16.msra.mxu0 0
    %398 = vmatprep.subr.bf16.mxu0 0
    %399 = vmatpush2.bf16.msra.mxu0 0
    %400 = vmatprep.subr.bf16.mxu0 0
    %401 = vmatpush2.bf16.msra.mxu0 0
    %402 = vmatprep.subr.bf16.mxu0 0
    %403 = vmatpush2.bf16.msra.mxu0 0
    %404 = vmatprep.subr.bf16.mxu0 0
    %405 = vmatpush2.bf16.msra.mxu0 0
    %406 = vmatprep.subr.bf16.mxu0 0
    %407 = vmatpush2.bf16.msra.mxu0 0
    %408 = vmatprep.subr.bf16.mxu0 0
    %409 = vmatpush2.bf16.msra.mxu0 0
    %410 = vmatprep.mubr.bf16.mxu0 0
    %411 = vmatmul.mubr.bf16.gmra.mxu0 %v376
    %v412 = vpop.f32.mrf.mxu0
    %v413 = vadd.f32 %v361, %v412
    %v414 = vpop.f32.mrf.mxu0
    %v415 = vpop.f32.mrf.mxu0
    %v416 = vadd.f32 %v361, %v415
    %v417 = vpop.f32.mrf.mxu0
    %418 = vdwg.mxu0
    %v419 = vxor.u32 %v413, 2147483648
    %v420 = vxor.u32 %v416, 2147483648
    %v421 = vmul.f32 %v419, 1.442695
    %v422 = vpow.pop %v421
    %v423 = vmul.f32 %v420, 1.442695
    %v424 = vpow.pop %v423
    %v425 = vadd.f32 %v422, 1.0
    %v426 = vadd.f32 %v424, 1.0
    %v427 = vrcp.pop %v425
    %v428 = vmul.f32 1.0, %v427
    %v429 = vrcp.pop %v426
    %v430 = vmul.f32 1.0, %v429
    %431 = vst [vmem:[#allocation5] sm:$0xff] %v428
    %432 = vst [vmem:[#allocation5 + $0x8] sm:$0xff] %v430
    // Predicated region
    $region22: #{tpu_custom_call.1} parent=1 // pred_check
      _
    $region23: #{tpu_custom_call.1} parent=1 // pred_check_branch
      %434 = sbr.rel (0) target = $region25
    $region24: #{tpu_custom_call.1} parent=1 // pred_region
      %s436 = ssub.s32 256, 256
      %437 = vsyncadd [#allocation4], %s436
      %s438 = sshll.u32 [#allocation5], 4
      %s439 = int_to_ptr.vmem [resolvable:$true] %s438
      %444 = dma.vmem_to_hbm [thread:$0]  %s439, 256, %s4, [#allocation4], 128, 128, 8
    $region25: #{tpu_custom_call.1} parent=1 // pred_fallthru
      _
    // Predicated region
    $region26: #{tpu_custom_call.1} parent=1 // pred_check
      _
    $region27: #{tpu_custom_call.1} parent=1 // pred_check_branch
      %446 = sbr.rel (0) target = $region29
    $region28: #{tpu_custom_call.1} parent=1 // pred_region
      %447 = dma.done [#allocation4], 256
    $region29: #{tpu_custom_call.1} parent=1 // pred_fallthru
      _
    %448 = vsyncpa [#allocation3], 1
    %449 = vsyncpa [#allocation4], 1

</llo_original>
